<compile_context>
chip_gen: v7x
topology: tpu7x:2x2x1
jax: 0.10.0
libtpu: 0.0.40
codegen_flags: <defaults>
</compile_context>

<pallas_src>
import numpy as np
import jax
import jax.numpy as jnp
from jax import lax
from jax.experimental import pallas as pl
from jax.experimental.pallas import tpu as pltpu

# --- map constants (home_robot MapConstants) ---
MC_OBSTACLE_MAP = 0
MC_EXPLORED_MAP = 1
MC_NON_SEM_CHANNELS = 4


def disk(radius: int) -> np.ndarray:
    """skimage.morphology.disk equivalent (x^2 + y^2 <= r^2)."""
    coords = np.arange(-radius, radius + 1)
    X, Y = np.meshgrid(coords, coords)
    return ((X ** 2 + Y ** 2) <= radius ** 2).astype(np.float32)


# Deterministic "parameters" — same as the frozen nn.Parameter disks in __init__.
EXPLORED_AREA_DILATION_RADIUS = 10
DILATE_EXPLORED_KERNEL = disk(EXPLORED_AREA_DILATION_RADIUS)  # (21, 21)
SELECT_BORDER_KERNEL = disk(1)                                # (3, 3)


def _round_up(x: int, m: int) -> int:
    return ((x + m - 1) // m) * m


def _disk_row_groups(disk_np: np.ndarray):
    """Decompose a (2r+1, 2r+1) binary disk into (half_width -> [row offsets]).

    Row offset d (= |di|) of the disk has support |dj| <= half_width(d), so
    binary dilation == max_d vshift(hdilate(x, half_width(d)), +-d).
    Returned sorted by ascending half_width so the horizontal dilation can be
    grown incrementally.  Offsets within a group are contiguous for a disk.
    """
    K = disk_np.shape[0]
    r = K // 2
    groups = {}
    for d in range(r + 1):
        nz = np.nonzero(disk_np[r + d])[0]
        w = int(nz.max()) - r
        groups.setdefault(w, []).append(d)
    out = sorted(groups.items())
    for _, offs in out:
        assert offs == list(range(min(offs), max(offs) + 1)), "non-contiguous group"
    return out


def _window_max(x, k: int, roll_fn):
    """One-sided running max over a contiguous window of k shifts (log2(k) rolls)."""
    if k <= 1:
        return x
    out = x
    length = 1
    while length < k:
        step = min(length, k - length)     # overlap is fine: max is idempotent
        out = jnp.maximum(out, roll_fn(out, step))
        length += step
    return out


def _binary_disk_dilate(xp, groups, Hp: int, Wp: int):
    """Exact binary dilation of a {0,1} (Hp, Wp) map (zero bottom/right halo).

    Lane rolls grow the horizontal run max incrementally; the vertical combine
    uses a doubling window-max per contiguous row-offset group.  Exact as long
    as the zero halo is >= the disk radius (circular wrap only ever pulls in
    halo zeros for the valid window).
    """
    def rl(a, s):                     # lane (last-dim) rotation
        s = s % Wp
        return a if s == 0 else pltpu.roll(a, s, axis=1)

    def rs(a, s):                     # sublane rotation
        s = s % Hp
        return a if s == 0 else pltpu.roll(a, s, axis=0)

    h = xp                            # horizontal dilation at current half-width
    cur_w = 0
    acc = None
    for w, offsets in groups:
        for s in range(cur_w + 1, w + 1):            # grow horizontal run max
            h = jnp.maximum(h, jnp.maximum(rl(xp, s), rl(xp, -s)))
        cur_w = w
        dmin, dmax = min(offsets), max(offsets)
        if dmax == 0:                                 # centre row group
            contrib = h
        else:
            k = dmax - dmin + 1
            p = _window_max(h, k, rs)                 # covers k contiguous shifts
            contrib = jnp.maximum(rs(p, dmin), rs(p, -dmax))   # +-[dmin, dmax]
        acc = contrib if acc is None else jnp.maximum(acc, contrib)
    return acc


def _make_fused_kernel(H, W, Hp, Wp, groups_explore, groups_border):
    H0 = (H // 8) * 8           # sublane-aligned floor of the interior height
    W0 = (W // 128) * 128       # lane-aligned floor of the interior width

    def kernel(cat_ref, explored_ref, catmap_ref, goal_ref, found_ref, pad_ref):
        del cat_ref  # only used inside the index_maps (scalar prefetch)

        # --- reach_goal_if_in_map: check the goal category first ------------
        cat_map = catmap_ref[0, 0]                                   # (H, W)
        goal_cat = (cat_map == 1.0).astype(jnp.float32)
        found = jnp.sum(goal_cat) > 0.0
        found_ref[...] = jnp.broadcast_to(found.astype(jnp.int32), (1, 1, 1))

        @pl.when(found)
        def _():
            goal_ref[0] = goal_cat

        # --- explore_otherwise: frontier map, only when the goal is absent --
        @pl.when(jnp.logical_not(found))
        def _():
            # Zero the halo with lane/sublane-aligned stores, then overwrite
            # the interior with the binarized explored channel.  Every scratch
            # element is written each step (no persistence assumptions).
            pad_ref[:, W0:] = jnp.zeros((Hp, Wp - W0), jnp.float32)
            if W0 > 0:
                pad_ref[H0:, :W0] = jnp.zeros((Hp - H0, W0), jnp.float32)
            pad_ref[:H, :W] = (explored_ref[0, 0] != 0.0).astype(jnp.float32)
            xp = pad_ref[...]

            # binary_dilation(explored != 0, disk(10)); binary => clamp == max
            dil = _binary_disk_dilate(xp, groups_explore, Hp, Wp)

            # frontier1 = 1 - dil on the valid window, 0 on the halo
            row = lax.broadcasted_iota(jnp.int32, (Hp, Wp), 0)
            col = lax.broadcasted_iota(jnp.int32, (Hp, Wp), 1)
            f1 = jnp.where((row < H) & (col < W), 1.0 - dil, 0.0)

            # frontier = binary_dilation(frontier1, disk(1)) - frontier1
            border = _binary_disk_dilate(f1, groups_border, Hp, Wp)
            goal_ref[0] = (border - f1)[:H, :W]

    return kernel


def objectnav_frontier_forward(map_features, object_category):
    """
    map_features: (B, 9 + num_sem_categories, M, M) float
    object_category: (B,) int
    Returns (goal_map (B, M, M) float32, found_goal (B,) bool)
    """
    B, C, H, W = map_features.shape
    r1 = EXPLORED_AREA_DILATION_RADIUS

    # Single-sided (bottom/right) zero halo >= r1, rounded to the (8, 128)
    # vreg tile.  The valid window sits at [0:H, 0:W]; circular rolls pull
    # only halo zeros into the valid window for shifts <= r1.
    halo = max(r1, 16)
    Hp = _round_up(H + halo, 8)
    Wp = _round_up(W + halo, 128)

    groups_explore = _disk_row_groups(DILATE_EXPLORED_KERNEL)
    groups_border = _disk_row_groups(SELECT_BORDER_KERNEL)

    kernel = _make_fused_kernel(H, W, Hp, Wp, groups_explore, groups_border)

    def cat_channel_map(b, cat):
        # NOTE: clamps out-of-range categories to a valid channel; the torch
        # reference would instead index out of bounds.  Documented divergence.
        ch = jnp.clip(cat[b] + 2 * MC_NON_SEM_CHANNELS, 0, C - 1)
        return (b, ch, 0, 0)

    grid_spec = pltpu.PrefetchScalarGridSpec(
        num_scalar_prefetch=1,
        grid=(B,),
        in_specs=[
            pl.BlockSpec((1, 1, H, W), lambda b, cat: (b, MC_EXPLORED_MAP, 0, 0)),
            pl.BlockSpec((1, 1, H, W), cat_channel_map),
        ],
        out_specs=[
            pl.BlockSpec((1, H, W), lambda b, cat: (b, 0, 0)),
            pl.BlockSpec((1, 1, 1), lambda b, cat: (b, 0, 0)),
        ],
        scratch_shapes=[pltpu.VMEM((Hp, Wp), jnp.float32)],
    )

    # VMEM budget: padded scratch + a handful of (Hp, Wp) f32 dilation
    # temporaries + double-buffered in/out blocks.  v7x only has 64 MiB of
    # physical VMEM, so request what we need instead of a blanket 48 MiB.
    tile_bytes = Hp * Wp * 4
    io_bytes = 2 * (3 * H * W * 4 + 8)
    vmem_limit = int(min(48 * 1024 * 1024,
                         max(16 * 1024 * 1024,
                             12 * tile_bytes + io_bytes + (2 << 20))))

    goal_map, found = pl.pallas_call(
        kernel,
        grid_spec=grid_spec,
        out_shape=(jax.ShapeDtypeStruct((B, H, W), jnp.float32),
                   jax.ShapeDtypeStruct((B, 1, 1), jnp.int32)),
        compiler_params=pltpu.CompilerParams(
            dimension_semantics=("parallel",),
            vmem_limit_bytes=vmem_limit),
    )(object_category.astype(jnp.int32), map_features, map_features)

    return goal_map, (found[:, 0, 0] > 0)


# ---------------------------------------------------------------------------
# Pure-JAX reference (for correctness check only)
# ---------------------------------------------------------------------------
def ref_forward(map_features, object_category):
    explored = map_features[:, MC_EXPLORED_MAP:MC_EXPLORED_MAP + 1]
    f0 = (explored == 0).astype(jnp.float32)
    k1 = jnp.asarray(DILATE_EXPLORED_KERNEL)[None, None]
    k2 = jnp.asarray(SELECT_BORDER_KERNEL)[None, None]
    r1 = DILATE_EXPLORED_KERNEL.shape[0] // 2
    r2 = SELECT_BORDER_KERNEL.shape[0] // 2
    d1 = jnp.clip(lax.conv_general_dilated(1 - f0, k1, (1, 1),
                                           [(r1, r1), (r1, r1)]), 0.0, 1.0)
    t = 1 - d1
    d2 = jnp.clip(lax.conv_general_dilated(t, k2, (1, 1),
                                           [(r2, r2), (r2, r2)]), 0.0, 1.0)
    frontier = (d2 - t)[:, 0]
    ch = object_category + 2 * MC_NON_SEM_CHANNELS
    cat_map = jnp.take_along_axis(map_features, ch[:, None, None, None], axis=1)[:, 0]
    goal_cat = (cat_map == 1.0).astype(jnp.float32)
    found = jnp.sum(goal_cat, axis=(1, 2)) > 0
    goal_map = jnp.where(found[:, None, None], goal_cat, frontier)
    return goal_map, found


if __name__ == "__main__":
    B, num_sem_categories, M = 2, 4, 16
    C = 9 + num_sem_categories  # per the forward docstring

    key = jax.random.PRNGKey(0)
    map_features = (jax.random.uniform(key, (B, C, M, M)) < 0.3).astype(jnp.float32)
    object_category = jnp.array([0, 1], dtype=jnp.int32)

    # batch 0: ensure the goal category is present (found_goal=True branch)
    map_features = map_features.at[0, 2 * MC_NON_SEM_CHANNELS + 0, 3, 5].set(1.0)
    # batch 1: wipe its category channel so it falls back to the frontier map
    map_features = map_features.at[1, 2 * MC_NON_SEM_CHANNELS + 1].set(0.0)

    goal_map, found_goal = objectnav_frontier_forward(map_features, object_category)
    jax.block_until_ready((goal_map, found_goal))

    ref_goal, ref_found = ref_forward(map_features, object_category)
    np.testing.assert_allclose(np.asarray(goal_map), np.asarray(ref_goal), atol=1e-5)
    np.testing.assert_array_equal(np.asarray(found_goal), np.asarray(ref_found))

    print("KERNEL_OK")
</pallas_src>

<mosaic_0001>
module attributes {stable_mosaic.version = 11 : i64} {
  func.func @kernel(%arg0: i32, %arg1: memref<2xi32, #tpu.memory_space<smem>>, %arg2: memref<1x1x16x16xf32, #tpu.memory_space<vmem>>, %arg3: memref<1x1x16x16xf32, #tpu.memory_space<vmem>>, %arg4: memref<1x16x16xf32, #tpu.memory_space<vmem>>, %arg5: memref<1x1x1xi32, #tpu.memory_space<vmem>>, %arg6: memref<32x128xf32, #tpu.memory_space<vmem>>) attributes {dimension_semantics = [#tpu.dimension_semantics<parallel>], iteration_bounds = array<i64: 2>, scalar_prefetch = 1 : i64, scratch_operands = 1 : i64, tpu.core_type = #tpu.core_type<tc>, window_params = [{transform_indices = @transform_0, window_bounds = array<i64: 1, 1, 16, 16>}, {transform_indices = @transform_1, window_bounds = array<i64: 1, 1, 16, 16>}, {transform_indices = @transform_2, window_bounds = array<i64: 1, 16, 16>}, {transform_indices = @transform_3, window_bounds = array<i64: 1, 1, 1>}]} {
    %c0 = arith.constant 0 : index
    %c0_0 = arith.constant 0 : index
    %c0_1 = arith.constant 0 : index
    %c0_2 = arith.constant 0 : index
    %0 = vector.load %arg3[%c0, %c0_0, %c0_1, %c0_2] : memref<1x1x16x16xf32, #tpu.memory_space<vmem>>, vector<1x1x16x16xf32>
    %1 = vector.shape_cast %0 : vector<1x1x16x16xf32> to vector<16x16xf32>
    %cst = arith.constant 1.000000e+00 : f32
    %2 = vector.broadcast %cst : f32 to vector<16x16xf32>
    %3 = arith.cmpf oeq, %1, %2 : vector<16x16xf32>
    %4 = arith.extui %3 : vector<16x16xi1> to vector<16x16xi32>
    %5 = arith.sitofp %4 : vector<16x16xi32> to vector<16x16xf32>
    %6 = vector.shape_cast %5 : vector<16x16xf32> to vector<1x16x16xf32>
    %cst_3 = arith.constant dense<0.000000e+00> : vector<1xf32>
    %7 = vector.multi_reduction <add>, %6, %cst_3 [1, 2] : vector<1x16x16xf32> to vector<1xf32>
    %8 = vector.shape_cast %7 : vector<1xf32> to vector<1x1x1xf32>
    %9 = vector.extract %8[0, 0, 0] : f32 from vector<1x1x1xf32>
    %cst_4 = arith.constant 0.000000e+00 : f32
    %10 = arith.cmpf ogt, %9, %cst_4 : f32
    %11 = arith.extui %10 : i1 to i32
    %12 = vector.broadcast %11 : i32 to vector<1x1x1xi32>
    %c0_5 = arith.constant 0 : index
    %c0_6 = arith.constant 0 : index
    %c0_7 = arith.constant 0 : index
    %13 = vector.load %arg5[%c0_5, %c0_6, %c0_7] : memref<1x1x1xi32, #tpu.memory_space<vmem>>, vector<1x1x1xi32>
    tpu.vector_store %arg5[%c0_5, %c0_6, %c0_7], %12 {strides = array<i32>} : memref<1x1x1xi32, #tpu.memory_space<vmem>>, vector<1x1x1xi32>,
    %14 = arith.extui %10 : i1 to i32
    %c0_i32 = arith.constant 0 : i32
    %15 = arith.cmpi ne, %14, %c0_i32 : i32
    scf.if %15 {
      %c0_9 = arith.constant 0 : index
      %c0_10 = arith.constant 0 : index
      %c0_11 = arith.constant 0 : index
      %19 = vector.load %arg4[%c0_9, %c0_10, %c0_11] : memref<1x16x16xf32, #tpu.memory_space<vmem>>, vector<1x16x16xf32>
      %20 = vector.shape_cast %19 : vector<1x16x16xf32> to vector<16x16xf32>
      %21 = vector.shape_cast %5 : vector<16x16xf32> to vector<1x16x16xf32>
      tpu.vector_store %arg4[%c0_9, %c0_10, %c0_11], %21 {strides = array<i32>} : memref<1x16x16xf32, #tpu.memory_space<vmem>>, vector<1x16x16xf32>,
    } else {
    }
    %true = arith.constant true
    %16 = arith.xori %10, %true : i1
    %17 = arith.extui %16 : i1 to i32
    %c0_i32_8 = arith.constant 0 : i32
    %18 = arith.cmpi ne, %17, %c0_i32_8 : i32
    scf.if %18 {
      %cst_9 = arith.constant 0.000000e+00 : f32
      %19 = vector.broadcast %cst_9 : f32 to vector<32x128xf32>
      %c0_10 = arith.constant 0 : index
      %c0_11 = arith.constant 0 : index
      %20 = vector.load %arg6[%c0_10, %c0_11] : memref<32x128xf32, #tpu.memory_space<vmem>>, vector<32x128xf32>
      tpu.vector_store %arg6[%c0_10, %c0_11], %19 {strides = array<i32>} : memref<32x128xf32, #tpu.memory_space<vmem>>, vector<32x128xf32>,
      %c0_12 = arith.constant 0 : index
      %c0_13 = arith.constant 0 : index
      %c0_14 = arith.constant 0 : index
      %c0_15 = arith.constant 0 : index
      %21 = vector.load %arg2[%c0_12, %c0_13, %c0_14, %c0_15] : memref<1x1x16x16xf32, #tpu.memory_space<vmem>>, vector<1x1x16x16xf32>
      %22 = vector.shape_cast %21 : vector<1x1x16x16xf32> to vector<16x16xf32>
      %cst_16 = arith.constant 0.000000e+00 : f32
      %23 = vector.broadcast %cst_16 : f32 to vector<16x16xf32>
      %24 = arith.cmpf one, %22, %23 : vector<16x16xf32>
      %25 = arith.extui %24 : vector<16x16xi1> to vector<16x16xi32>
      %26 = arith.sitofp %25 : vector<16x16xi32> to vector<16x16xf32>
      %c0_17 = arith.constant 0 : index
      %c0_18 = arith.constant 0 : index
      %27 = vector.load %arg6[%c0_17, %c0_18] : memref<32x128xf32, #tpu.memory_space<vmem>>, vector<16x16xf32>
      tpu.vector_store %arg6[%c0_17, %c0_18], %26 {strides = array<i32>} : memref<32x128xf32, #tpu.memory_space<vmem>>, vector<16x16xf32>,
      %c0_19 = arith.constant 0 : index
      %c0_20 = arith.constant 0 : index
      %28 = vector.load %arg6[%c0_19, %c0_20] : memref<32x128xf32, #tpu.memory_space<vmem>>, vector<32x128xf32>
      %c10_i32 = arith.constant 10 : i32
      %29 = tpu.dynamic_rotate %28 by %c10_i32 dim 0 : vector<32x128xf32>, i32 -> vector<32x128xf32>
      %c22_i32 = arith.constant 22 : i32
      %30 = tpu.dynamic_rotate %28 by %c22_i32 dim 0 : vector<32x128xf32>, i32 -> vector<32x128xf32>
      %31 = arith.maximumf %29, %30 : vector<32x128xf32>
      %c1_i32 = arith.constant 1 : i32
      %32 = tpu.dynamic_rotate %28 by %c1_i32 dim 1 : vector<32x128xf32>, i32 -> vector<32x128xf32>
      %c127_i32 = arith.constant 127 : i32
      %33 = tpu.dynamic_rotate %28 by %c127_i32 dim 1 : vector<32x128xf32>, i32 -> vector<32x128xf32>
      %34 = arith.maximumf %32, %33 : vector<32x128xf32>
      %35 = arith.maximumf %28, %34 : vector<32x128xf32>
      %c2_i32 = arith.constant 2 : i32
      %36 = tpu.dynamic_rotate %28 by %c2_i32 dim 1 : vector<32x128xf32>, i32 -> vector<32x128xf32>
      %c126_i32 = arith.constant 126 : i32
      %37 = tpu.dynamic_rotate %28 by %c126_i32 dim 1 : vector<32x128xf32>, i32 -> vector<32x128xf32>
      %38 = arith.maximumf %36, %37 : vector<32x128xf32>
      %39 = arith.maximumf %35, %38 : vector<32x128xf32>
      %c3_i32 = arith.constant 3 : i32
      %40 = tpu.dynamic_rotate %28 by %c3_i32 dim 1 : vector<32x128xf32>, i32 -> vector<32x128xf32>
      %c125_i32 = arith.constant 125 : i32
      %41 = tpu.dynamic_rotate %28 by %c125_i32 dim 1 : vector<32x128xf32>, i32 -> vector<32x128xf32>
      %42 = arith.maximumf %40, %41 : vector<32x128xf32>
      %43 = arith.maximumf %39, %42 : vector<32x128xf32>
      %c4_i32 = arith.constant 4 : i32
      %44 = tpu.dynamic_rotate %28 by %c4_i32 dim 1 : vector<32x128xf32>, i32 -> vector<32x128xf32>
      %c124_i32 = arith.constant 124 : i32
      %45 = tpu.dynamic_rotate %28 by %c124_i32 dim 1 : vector<32x128xf32>, i32 -> vector<32x128xf32>
      %46 = arith.maximumf %44, %45 : vector<32x128xf32>
      %47 = arith.maximumf %43, %46 : vector<32x128xf32>
      %c9_i32 = arith.constant 9 : i32
      %48 = tpu.dynamic_rotate %47 by %c9_i32 dim 0 : vector<32x128xf32>, i32 -> vector<32x128xf32>
      %c23_i32 = arith.constant 23 : i32
      %49 = tpu.dynamic_rotate %47 by %c23_i32 dim 0 : vector<32x128xf32>, i32 -> vector<32x128xf32>
      %50 = arith.maximumf %48, %49 : vector<32x128xf32>
      %51 = arith.maximumf %31, %50 : vector<32x128xf32>
      %c5_i32 = arith.constant 5 : i32
      %52 = tpu.dynamic_rotate %28 by %c5_i32 dim 1 : vector<32x128xf32>, i32 -> vector<32x128xf32>
      %c123_i32 = arith.constant 123 : i32
      %53 = tpu.dynamic_rotate %28 by %c123_i32 dim 1 : vector<32x128xf32>, i32 -> vector<32x128xf32>
      %54 = arith.maximumf %52, %53 : vector<32x128xf32>
      %55 = arith.maximumf %47, %54 : vector<32x128xf32>
      %c6_i32 = arith.constant 6 : i32
      %56 = tpu.dynamic_rotate %28 by %c6_i32 dim 1 : vector<32x128xf32>, i32 -> vector<32x128xf32>
      %c122_i32 = arith.constant 122 : i32
      %57 = tpu.dynamic_rotate %28 by %c122_i32 dim 1 : vector<32x128xf32>, i32 -> vector<32x128xf32>
      %58 = arith.maximumf %56, %57 : vector<32x128xf32>
      %59 = arith.maximumf %55, %58 : vector<32x128xf32>
      %c8_i32 = arith.constant 8 : i32
      %60 = tpu.dynamic_rotate %59 by %c8_i32 dim 0 : vector<32x128xf32>, i32 -> vector<32x128xf32>
      %c24_i32 = arith.constant 24 : i32
      %61 = tpu.dynamic_rotate %59 by %c24_i32 dim 0 : vector<32x128xf32>, i32 -> vector<32x128xf32>
      %62 = arith.maximumf %60, %61 : vector<32x128xf32>
      %63 = arith.maximumf %51, %62 : vector<32x128xf32>
      %c7_i32 = arith.constant 7 : i32
      %64 = tpu.dynamic_rotate %28 by %c7_i32 dim 1 : vector<32x128xf32>, i32 -> vector<32x128xf32>
      %c121_i32 = arith.constant 121 : i32
      %65 = tpu.dynamic_rotate %28 by %c121_i32 dim 1 : vector<32x128xf32>, i32 -> vector<32x128xf32>
      %66 = arith.maximumf %64, %65 : vector<32x128xf32>
      %67 = arith.maximumf %59, %66 : vector<32x128xf32>
      %c7_i32_21 = arith.constant 7 : i32
      %68 = tpu.dynamic_rotate %67 by %c7_i32_21 dim 0 : vector<32x128xf32>, i32 -> vector<32x128xf32>
      %c25_i32 = arith.constant 25 : i32
      %69 = tpu.dynamic_rotate %67 by %c25_i32 dim 0 : vector<32x128xf32>, i32 -> vector<32x128xf32>
      %70 = arith.maximumf %68, %69 : vector<32x128xf32>
      %71 = arith.maximumf %63, %70 : vector<32x128xf32>
      %c8_i32_22 = arith.constant 8 : i32
      %72 = tpu.dynamic_rotate %28 by %c8_i32_22 dim 1 : vector<32x128xf32>, i32 -> vector<32x128xf32>
      %c120_i32 = arith.constant 120 : i32
      %73 = tpu.dynamic_rotate %28 by %c120_i32 dim 1 : vector<32x128xf32>, i32 -> vector<32x128xf32>
      %74 = arith.maximumf %72, %73 : vector<32x128xf32>
      %75 = arith.maximumf %67, %74 : vector<32x128xf32>
      %c1_i32_23 = arith.constant 1 : i32
      %76 = tpu.dynamic_rotate %75 by %c1_i32_23 dim 0 : vector<32x128xf32>, i32 -> vector<32x128xf32>
      %77 = arith.maximumf %75, %76 : vector<32x128xf32>
      %c5_i32_24 = arith.constant 5 : i32
      %78 = tpu.dynamic_rotate %77 by %c5_i32_24 dim 0 : vector<32x128xf32>, i32 -> vector<32x128xf32>
      %c26_i32 = arith.constant 26 : i32
      %79 = tpu.dynamic_rotate %77 by %c26_i32 dim 0 : vector<32x128xf32>, i32 -> vector<32x128xf32>
      %80 = arith.maximumf %78, %79 : vector<32x128xf32>
      %81 = arith.maximumf %71, %80 : vector<32x128xf32>
      %c9_i32_25 = arith.constant 9 : i32
      %82 = tpu.dynamic_rotate %28 by %c9_i32_25 dim 1 : vector<32x128xf32>, i32 -> vector<32x128xf32>
      %c119_i32 = arith.constant 119 : i32
      %83 = tpu.dynamic_rotate %28 by %c119_i32 dim 1 : vector<32x128xf32>, i32 -> vector<32x128xf32>
      %84 = arith.maximumf %82, %83 : vector<32x128xf32>
      %85 = arith.maximumf %75, %84 : vector<32x128xf32>
      %c1_i32_26 = arith.constant 1 : i32
      %86 = tpu.dynamic_rotate %85 by %c1_i32_26 dim 0 : vector<32x128xf32>, i32 -> vector<32x128xf32>
      %87 = arith.maximumf %85, %86 : vector<32x128xf32>
      %c2_i32_27 = arith.constant 2 : i32
      %88 = tpu.dynamic_rotate %87 by %c2_i32_27 dim 0 : vector<32x128xf32>, i32 -> vector<32x128xf32>
      %89 = arith.maximumf %87, %88 : vector<32x128xf32>
      %c1_i32_28 = arith.constant 1 : i32
      %90 = tpu.dynamic_rotate %89 by %c1_i32_28 dim 0 : vector<32x128xf32>, i32 -> vector<32x128xf32>
      %c28_i32 = arith.constant 28 : i32
      %91 = tpu.dynamic_rotate %89 by %c28_i32 dim 0 : vector<32x128xf32>, i32 -> vector<32x128xf32>
      %92 = arith.maximumf %90, %91 : vector<32x128xf32>
      %93 = arith.maximumf %81, %92 : vector<32x128xf32>
      %c10_i32_29 = arith.constant 10 : i32
      %94 = tpu.dynamic_rotate %28 by %c10_i32_29 dim 1 : vector<32x128xf32>, i32 -> vector<32x128xf32>
      %c118_i32 = arith.constant 118 : i32
      %95 = tpu.dynamic_rotate %28 by %c118_i32 dim 1 : vector<32x128xf32>, i32 -> vector<32x128xf32>
      %96 = arith.maximumf %94, %95 : vector<32x128xf32>
      %97 = arith.maximumf %85, %96 : vector<32x128xf32>
      %98 = arith.maximumf %93, %97 : vector<32x128xf32>
      %99 = tpu.iota {dimensions = array<i32: 0>} : vector<32x128xi32>
      %100 = tpu.iota {dimensions = array<i32: 1>} : vector<32x128xi32>
      %c16_i32 = arith.constant 16 : i32
      %101 = vector.broadcast %c16_i32 : i32 to vector<32x128xi32>
      %102 = arith.cmpi slt, %99, %101 : vector<32x128xi32>
      %c16_i32_30 = arith.constant 16 : i32
      %103 = vector.broadcast %c16_i32_30 : i32 to vector<32x128xi32>
      %104 = arith.cmpi slt, %100, %103 : vector<32x128xi32>
      %105 = arith.andi %102, %104 : vector<32x128xi1>
      %cst_31 = arith.constant 1.000000e+00 : f32
      %106 = vector.broadcast %cst_31 : f32 to vector<32x128xf32>
      %107 = arith.subf %106, %98 : vector<32x128xf32>
      %cst_32 = arith.constant 0.000000e+00 : f32
      %108 = vector.broadcast %cst_32 : f32 to vector<32x128xf32>
      %109 = arith.select %105, %107, %108 : vector<32x128xi1>, vector<32x128xf32>
      %c1_i32_33 = arith.constant 1 : i32
      %110 = tpu.dynamic_rotate %109 by %c1_i32_33 dim 0 : vector<32x128xf32>, i32 -> vector<32x128xf32>
      %c31_i32 = arith.constant 31 : i32
      %111 = tpu.dynamic_rotate %109 by %c31_i32 dim 0 : vector<32x128xf32>, i32 -> vector<32x128xf32>
      %112 = arith.maximumf %110, %111 : vector<32x128xf32>
      %c1_i32_34 = arith.constant 1 : i32
      %113 = tpu.dynamic_rotate %109 by %c1_i32_34 dim 1 : vector<32x128xf32>, i32 -> vector<32x128xf32>
      %c127_i32_35 = arith.constant 127 : i32
      %114 = tpu.dynamic_rotate %109 by %c127_i32_35 dim 1 : vector<32x128xf32>, i32 -> vector<32x128xf32>
      %115 = arith.maximumf %113, %114 : vector<32x128xf32>
      %116 = arith.maximumf %109, %115 : vector<32x128xf32>
      %117 = arith.maximumf %112, %116 : vector<32x128xf32>
      %118 = arith.subf %117, %109 : vector<32x128xf32>
      %119 = vector.extract_strided_slice %118 {offsets = [0, 0], sizes = [16, 16], strides = [1, 1]} : vector<32x128xf32> to vector<16x16xf32>
      %c0_36 = arith.constant 0 : index
      %c0_37 = arith.constant 0 : index
      %c0_38 = arith.constant 0 : index
      %120 = vector.load %arg4[%c0_36, %c0_37, %c0_38] : memref<1x16x16xf32, #tpu.memory_space<vmem>>, vector<1x16x16xf32>
      %121 = vector.shape_cast %120 : vector<1x16x16xf32> to vector<16x16xf32>
      %122 = vector.shape_cast %119 : vector<16x16xf32> to vector<1x16x16xf32>
      tpu.vector_store %arg4[%c0_36, %c0_37, %c0_38], %122 {strides = array<i32>} : memref<1x16x16xf32, #tpu.memory_space<vmem>>, vector<1x16x16xf32>,
    } else {
    }
    return
  }
  func.func @transform_0(%arg0: i32, %arg1: memref<2xi32, #tpu.memory_space<smem>>) -> (i32, i32, i32, i32) {
    %c1_i32 = arith.constant 1 : i32
    %c0_i32 = arith.constant 0 : i32
    %c0_i32_0 = arith.constant 0 : i32
    %c0_i32_1 = arith.constant 0 : i32
    return %arg0, %c1_i32, %c0_i32, %c0_i32_0 : i32, i32, i32, i32
  }
  func.func @transform_1(%arg0: i32, %arg1: memref<2xi32, #tpu.memory_space<smem>>) -> (i32, i32, i32, i32) {
    %0 = arith.index_cast %arg0 : i32 to index
    %1 = memref.load %arg1[%0] : memref<2xi32, #tpu.memory_space<smem>>
    %c8_i32 = arith.constant 8 : i32
    %2 = arith.addi %1, %c8_i32 : i32
    %c0_i32 = arith.constant 0 : i32
    %c12_i32 = arith.constant 12 : i32
    %3 = arith.maxsi %c0_i32, %2 : i32
    %4 = arith.minsi %c12_i32, %3 : i32
    %c0_i32_0 = arith.constant 0 : i32
    %c0_i32_1 = arith.constant 0 : i32
    %c0_i32_2 = arith.constant 0 : i32
    return %arg0, %4, %c0_i32_0, %c0_i32_1 : i32, i32, i32, i32
  }
  func.func @transform_2(%arg0: i32, %arg1: memref<2xi32, #tpu.memory_space<smem>>) -> (i32, i32, i32) {
    %c0_i32 = arith.constant 0 : i32
    %c0_i32_0 = arith.constant 0 : i32
    %c0_i32_1 = arith.constant 0 : i32
    return %arg0, %c0_i32, %c0_i32_0 : i32, i32, i32
  }
  func.func @transform_3(%arg0: i32, %arg1: memref<2xi32, #tpu.memory_space<smem>>) -> (i32, i32, i32) {
    %c0_i32 = arith.constant 0 : i32
    %c0_i32_0 = arith.constant 0 : i32
    %c0_i32_1 = arith.constant 0 : i32
    return %arg0, %c0_i32, %c0_i32_0 : i32, i32, i32
  }
}

</mosaic_0001>

<llo_original>
// kernel: tpu_custom_call.1
$region0: #{tpu_custom_call.1}
  #allocation0 [shape = 'u32[]', space=smem, size = 0x4, offset = 0x4, fixed_abs, tag = 'smem constant byte address 0x4 - core index']
  #allocation1 [shape = 'u32[144,128]{1,0:T(1,128)}', space=vmem, size = 0x12000, scoped, tag = 'internal scratch']
  #allocation2 [shape = 'f32[32,128]{1,0:T(8,128)}', space=vmem, size = 0x4000, scoped, tag = 'scratch operand']
  #allocation3 [shape = 's32[1]{0}', space=sflag, size = 0x4, scoped, tag = 'scoped memory for tpu_custom_call.1']
  #allocation4 [shape = 'u8[512]{0}', space=smem, size = 0x200, scoped, tag = 'prefetched SMEM operand 0']
  %s0 = inlined_call_operand.hbm [shape: s32[2], index: 0, kind: input, shape index: {}]
  %s1 = inlined_call_operand.hbm [shape: f32[2,13,16,16], index: 1, kind: input, shape index: {}]
  %s2 = inlined_call_operand.hbm [shape: f32[2,13,16,16], index: 2, kind: input, shape index: {}]
  %s3 = inlined_call_operand.hbm [shape: f32[2,16,16], index: 3, kind: output, shape index: {0}]
  %s4 = inlined_call_operand.vmem [shape: s32[2,1,1], index: 4, kind: output, shape index: {1}]
  %5 = xla_tuple %s3, %s4
  %s6 = sld [smem:[#allocation0]]
  $region65: #{tpu_custom_call.1} parent=0
    _
  %s8 = ssub.s32 1, %s6
  %s9 = scalar_select 0, %s8, %s6
  %11 = dma.hbm_to_smem %s0, 16, [#allocation4], [#allocation3]
  %12 = dma.done [#allocation3], 16
  %13 = sfence
  $region1: #{tpu_custom_call.1} parent=0
    #allocation5 [shape = 'u8[16384]{0}', space=vmem, size = 0x4000, scoped, tag = 'input window, operand 1']
    #allocation6 [shape = 's32[2]{0}', space=sflag, size = 0x8, scoped, tag = 'scoped memory for tpu_custom_call.1']
    #allocation7 [shape = 's32[2]{0}', space=sflag, size = 0x8, scoped, tag = 'scoped memory for tpu_custom_call.1']
    #allocation8 [shape = 'u8[16384]{0}', space=vmem, size = 0x4000, scoped, tag = 'input window, operand 2']
    #allocation9 [shape = 's32[2]{0}', space=sflag, size = 0x8, scoped, tag = 'scoped memory for tpu_custom_call.1']
    #allocation10 [shape = 'u8[16384]{0}', space=vmem, size = 0x4000, scoped, tag = 'output window, operand 0']
    %14 = vsyncpa [#allocation6], 0
    %s15 = scalar_lea.sflag [#allocation6], 1
    %16 = vsyncpa %s15, 0
    %17 = vsyncpa [#allocation9], 0
    %s18 = scalar_lea.sflag [#allocation9], 1
    %19 = vsyncpa %s18, 0
    %20 = vsyncpa [#allocation7], 0
    %s21 = scalar_lea.sflag [#allocation7], 1
    %22 = vsyncpa %s21, 0
    loop: start=0, step=1, limit=4
    $region2: #{tpu_custom_call.1} parent=1 // loop_pre_header
      _
    $region3: #{tpu_custom_call.1} parent=1 // loop_header
      %s24 = sphi 0, %s28
      %p25 = scmp.ge.s32.totalorder %s24, 4
      %s34 = sphi 0, %s36
      %s37 = sphi 0, %s34
      %s38 = sphi 0, %s37
      %s54 = sphi 0, %s38
      %s74 = sphi 0, %s76
      %s77 = sphi 0, %s74
      %s78 = sphi 0, %s77
      %s94 = sphi 0, %s78
      %s100 = sphi 0, %s102
      %s103 = sphi 0, %s100
      %s104 = sphi 0, %s103
      %s120 = sphi 0, %s104
      %s126 = sphi 0, %s128
      %s129 = sphi 0, %s126
      %s130 = sphi 0, %s129
      %s146 = sphi 0, %s130
    $region4: #{tpu_custom_call.1} parent=1 // loop_header_branch
      %27 = sbr.rel (%p25) target = $region8
    $region5: #{tpu_custom_call.1} parent=1 // loop_body
      %s29 = ssub.s32 %s24, 1
      %s30 = ssub.s32 %s24, 2
      %s31 = sadd.s32 %s24, 1
      %s32 = ssub.s32 %s24, %s31
      %p33 = scmp.eq.s32.totalorder %s32, 0
      %s35 = sadd.s32 %s34, 1
      %s36 = scalar_select %p33, %s34, %s35
      %p39 = pneg %p33
      %p40 = scmp.eq.s32.totalorder %s24, 1
      %p41 = por %p39, %p40
      %p42 = scmp.ne.s32.totalorder %s34, %s37
      %p43 = scmp.eq.s32.totalorder %s24, 0
      %p44 = por %p42, %p43
      %p45 = scmp.ne.s32.totalorder %s34, %s37
      %p46 = scmp.eq.s32.totalorder %s29, 1
      %p47 = por %p45, %p46
      %p48 = scmp.ne.s32.totalorder %s37, %s38
      %p49 = scmp.eq.s32.totalorder %s29, 0
      %p50 = por %p48, %p49
      %p51 = scmp.ne.s32.totalorder %s37, %s38
      %p52 = scmp.eq.s32.totalorder %s30, 1
      %p53 = por %p51, %p52
      %p55 = scmp.ne.s32.totalorder %s38, %s54
      %p56 = scmp.eq.s32.totalorder %s30, 0
      %p57 = por %p55, %p56
      %s58 = sld [smem:[#allocation4 + %s24]]
      %s59 = sadd.s32 %s58, 8
      %p60 = scmp.gt.s32.totalorder %s59, 0
      %s61 = scalar_select %p60, %s59, 0
      %p62 = scmp.lt.s32.totalorder %s61, 12
      %s63 = scalar_select %p62, %s61, 12
      %s64 = sld [smem:[#allocation4 + %s31]]
      %s65 = sadd.s32 %s64, 8
      %p66 = scmp.gt.s32.totalorder %s65, 0
      %s67 = scalar_select %p66, %s65, 0
      %p68 = scmp.lt.s32.totalorder %s67, 12
      %s69 = scalar_select %p68, %s67, 12
      %s70 = ssub.s32 %s24, %s31
      %s71 = ssub.s32 %s63, %s69
      %s72 = sor.u32 %s70, %s71
      %p73 = scmp.eq.s32.totalorder %s72, 0
      %s75 = sadd.s32 %s74, 1
      %s76 = scalar_select %p73, %s74, %s75
      %p79 = pneg %p73
      %p80 = scmp.eq.s32.totalorder %s24, 1
      %p81 = por %p79, %p80
      %p82 = scmp.ne.s32.totalorder %s74, %s77
      %p83 = scmp.eq.s32.totalorder %s24, 0
      %p84 = por %p82, %p83
      %p85 = scmp.ne.s32.totalorder %s74, %s77
      %p86 = scmp.eq.s32.totalorder %s29, 1
      %p87 = por %p85, %p86
      %p88 = scmp.ne.s32.totalorder %s77, %s78
      %p89 = scmp.eq.s32.totalorder %s29, 0
      %p90 = por %p88, %p89
      %p91 = scmp.ne.s32.totalorder %s77, %s78
      %p92 = scmp.eq.s32.totalorder %s30, 1
      %p93 = por %p91, %p92
      %p95 = scmp.ne.s32.totalorder %s78, %s94
      %p96 = scmp.eq.s32.totalorder %s30, 0
      %p97 = por %p95, %p96
      %s98 = ssub.s32 %s24, %s31
      %p99 = scmp.eq.s32.totalorder %s98, 0
      %s101 = sadd.s32 %s100, 1
      %s102 = scalar_select %p99, %s100, %s101
      %p105 = pneg %p99
      %p106 = scmp.eq.s32.totalorder %s24, 1
      %p107 = por %p105, %p106
      %p108 = scmp.ne.s32.totalorder %s100, %s103
      %p109 = scmp.eq.s32.totalorder %s24, 0
      %p110 = por %p108, %p109
      %p111 = scmp.ne.s32.totalorder %s100, %s103
      %p112 = scmp.eq.s32.totalorder %s29, 1
      %p113 = por %p111, %p112
      %p114 = scmp.ne.s32.totalorder %s103, %s104
      %p115 = scmp.eq.s32.totalorder %s29, 0
      %p116 = por %p114, %p115
      %p117 = scmp.ne.s32.totalorder %s103, %s104
      %p118 = scmp.eq.s32.totalorder %s30, 1
      %p119 = por %p117, %p118
      %p121 = scmp.ne.s32.totalorder %s104, %s120
      %p122 = scmp.eq.s32.totalorder %s30, 0
      %p123 = por %p121, %p122
      %s124 = ssub.s32 %s24, %s31
      %p125 = scmp.eq.s32.totalorder %s124, 0
      %s127 = sadd.s32 %s126, 1
      %s128 = scalar_select %p125, %s126, %s127
      %p131 = pneg %p125
      %p132 = scmp.eq.s32.totalorder %s24, 1
      %p133 = por %p131, %p132
      %p134 = scmp.ne.s32.totalorder %s126, %s129
      %p135 = scmp.eq.s32.totalorder %s24, 0
      %p136 = por %p134, %p135
      %p137 = scmp.ne.s32.totalorder %s126, %s129
      %p138 = scmp.eq.s32.totalorder %s29, 1
      %p139 = por %p137, %p138
      %p140 = scmp.ne.s32.totalorder %s129, %s130
      %p141 = scmp.eq.s32.totalorder %s29, 0
      %p142 = por %p140, %p141
      %p143 = scmp.ne.s32.totalorder %s129, %s130
      %p144 = scmp.eq.s32.totalorder %s30, 1
      %p145 = por %p143, %p144
      %p147 = scmp.ne.s32.totalorder %s130, %s146
      %p148 = scmp.eq.s32.totalorder %s30, 0
      %p149 = por %p147, %p148
      %p150 = scmp.le.s32.totalorder 1, %s24
      %p151 = scmp.lt.s32.totalorder %s24, 3
      %p152 = pnand %p150, %p151
      %p153 = pneg %p152
      // Predicated region
      $region9: #{tpu_custom_call.1} parent=5 // pred_check
        _
      $region10: #{tpu_custom_call.1} parent=5 // pred_check_branch
        %155 = sbr.rel (%p152) target = $region12
      $region11: #{tpu_custom_call.1} parent=5 // pred_region
        %s156 = ssub.s32 %s24, 1
      $region12: #{tpu_custom_call.1} parent=5 // pred_fallthru
        _
      %p157 = scmp.lt.s32.totalorder %s24, 2
      // Predicated region
      $region13: #{tpu_custom_call.1} parent=5 // pred_check
        %p158 = pneg %p157
      $region14: #{tpu_custom_call.1} parent=5 // pred_check_branch
        %160 = sbr.rel (%p158) target = $region16
      $region15: #{tpu_custom_call.1} parent=5 // pred_region
        // Predicated region
        $region17: #{tpu_custom_call.1} parent=15 // pred_check
          %p161 = pneg %p44
        $region18: #{tpu_custom_call.1} parent=15 // pred_check_branch
          %163 = sbr.rel (%p161) target = $region20
        $region19: #{tpu_custom_call.1} parent=15 // pred_region
          %s164 = sand.u32 %s34, 1
          %s165 = scalar_lea.sflag [#allocation6], %s164
          %s166 = sand.u32 %s34, 1
          %s167 = smul.addr %s166, 16
          %s168 = scalar_lea.vmem [#allocation5], %s167
          %s170 = ssub.s32 256, 256
          %171 = vsyncadd %s165, %s170
          %s172 = smul.addr %s24, 26
          %s173 = sadd.s32 2, %s172
          %s174 = smul.addr %s173, 128
          %s175 = scalar_lea.hbm %s1, %s174
          %s176 = sshll.u32 %s168, 4
          %s177 = int_to_ptr.vmem [resolvable:$true] %s176
          %182 = dma.hbm_to_vmem [thread:$0]  %s175, 256, %s177, %s165, 128, 128, 8
        $region20: #{tpu_custom_call.1} parent=15 // pred_fallthru
          _
        // Predicated region
        $region21: #{tpu_custom_call.1} parent=15 // pred_check
          %p183 = pneg %p84
        $region22: #{tpu_custom_call.1} parent=15 // pred_check_branch
          %185 = sbr.rel (%p183) target = $region24
        $region23: #{tpu_custom_call.1} parent=15 // pred_region
          %s186 = sand.u32 %s74, 1
          %s187 = scalar_lea.sflag [#allocation9], %s186
          %s188 = sand.u32 %s74, 1
          %s189 = smul.addr %s188, 16
          %s190 = scalar_lea.vmem [#allocation8], %s189
          %s191 = sld [smem:[#allocation4 + %s24]]
          %s192 = sadd.s32 %s191, 8
          %p193 = scmp.gt.s32.totalorder %s192, 0
          %s194 = scalar_select %p193, %s192, 0
          %p195 = scmp.lt.s32.totalorder %s194, 12
          %s196 = scalar_select %p195, %s194, 12
          %s198 = ssub.s32 256, 256
          %199 = vsyncadd %s187, %s198
          %s200 = smul.addr %s196, 2
          %s201 = smul.addr %s24, 26
          %s202 = sadd.s32 %s200, %s201
          %s203 = smul.addr %s202, 128
          %s204 = scalar_lea.hbm %s2, %s203
          %s205 = sshll.u32 %s190, 4
          %s206 = int_to_ptr.vmem [resolvable:$true] %s205
          %211 = dma.hbm_to_vmem [thread:$0]  %s204, 256, %s206, %s187, 128, 128, 8
        $region24: #{tpu_custom_call.1} parent=15 // pred_fallthru
          _
      $region16: #{tpu_custom_call.1} parent=5 // pred_fallthru
        _
      %p212 = scmp.le.s32.totalorder 1, %s24
      %p213 = scmp.lt.s32.totalorder %s24, 3
      %p214 = pnand %p212, %p213
      %p215 = pneg %p214
      // Predicated region
      $region25: #{tpu_custom_call.1} parent=5 // pred_check
        _
      $region26: #{tpu_custom_call.1} parent=5 // pred_check_branch
        %217 = sbr.rel (%p214) target = $region28
      $region27: #{tpu_custom_call.1} parent=5 // pred_region
        %s218 = ssub.s32 %s24, 1
        %s219 = sand.u32 %s37, 1
        %s220 = scalar_lea.sflag [#allocation6], %s219
        %s221 = sand.u32 %s37, 1
        %s222 = smul.addr %s221, 16
        %s223 = scalar_lea.vmem [#allocation5], %s222
        // Predicated region
        $region29: #{tpu_custom_call.1} parent=27 // pred_check
          %p224 = pneg %p50
        $region30: #{tpu_custom_call.1} parent=27 // pred_check_branch
          %226 = sbr.rel (%p224) target = $region32
        $region31: #{tpu_custom_call.1} parent=27 // pred_region
          %227 = dma.done %s220, 256
        $region32: #{tpu_custom_call.1} parent=27 // pred_fallthru
          _
        %s228 = sand.u32 %s77, 1
        %s229 = scalar_lea.sflag [#allocation9], %s228
        %s230 = sand.u32 %s77, 1
        %s231 = smul.addr %s230, 16
        %s232 = scalar_lea.vmem [#allocation8], %s231
        // Predicated region
        $region33: #{tpu_custom_call.1} parent=27 // pred_check
          %p233 = pneg %p90
        $region34: #{tpu_custom_call.1} parent=27 // pred_check_branch
          %235 = sbr.rel (%p233) target = $region36
        $region35: #{tpu_custom_call.1} parent=27 // pred_region
          %236 = dma.done %s229, 256
        $region36: #{tpu_custom_call.1} parent=27 // pred_fallthru
          _
        %s237 = sand.u32 %s37, 1
        %s238 = scalar_lea.sflag [#allocation6], %s237
        %s239 = sand.u32 %s37, 1
        %s240 = smul.addr %s239, 16
        %s241 = scalar_lea.vmem [#allocation5], %s240
        %p242 = pneg %p50
        %p243 = pneg %p47
        %s244 = sand.u32 %s77, 1
        %s245 = scalar_lea.sflag [#allocation9], %s244
        %s246 = sand.u32 %s77, 1
        %s247 = smul.addr %s246, 16
        %s248 = scalar_lea.vmem [#allocation8], %s247
        %p249 = pneg %p90
        %p250 = pneg %p87
        %p251 = pneg %p116
        %p252 = pneg %p113
        %s253 = sand.u32 %s103, 1
        %s254 = scalar_lea.sflag [#allocation7], %s253
        %s255 = sand.u32 %s103, 1
        %s256 = smul.addr %s255, 16
        %s257 = scalar_lea.vmem [#allocation10], %s256
        %p258 = pneg %p142
        %p259 = pneg %p139
        %p260 = scmp.lt.s32.totalorder %s29, 1
        %s261 = scalar_select %p260, %s29, 1
        %s262 = scalar_lea.vmem %s4, %s261
        %s263 = sld [smem:[#allocation4 + %s29]]
        %s264 = sadd.s32 %s263, 8
        %p265 = scmp.gt.s32.totalorder %s264, 0
        %s266 = scalar_select %p265, %s264, 0
        %p267 = scmp.lt.s32.totalorder %s266, 12
        %s268 = scalar_select %p267, %s266, 12
        %p269 = scmp.lt.s32.totalorder %s29, 1
        %s270 = scalar_select %p269, %s29, 1
        %s271 = scalar_lea.vmem %s4, %s270
        %v272 = vld [vmem:[%s232] sm:$0xff]
        %v273 = vld [vmem:[%s232 + $0x8] sm:$0xff]
        %vm274 = vcmp.eq.f32.partialorder %v272, 1.0
        %vm275 = vcmp.eq.f32.partialorder %v273, 1.0
        %v276 = vsel %vm274, 1, 0
        %v277 = vsel %vm275, 1, 0
        %v278 = vcvt.s32.f32 %v276
        %v279 = vcvt.s32.f32 %v277
        %vm280 = vcmask 130048
        %v281 = vsel %vm280, %v278, 0.0
        %v282 = vsel %vm280, %v279, 0.0
        %v283 = vadd.f32 %v281, %v282
        %284 = vadd.xlane.f32.xlu0 %v283
        %v285 = vpop.xlane.xlu0 %284
        %v286 = vrot.slane %v285, 4
        %v287 = vadd.f32 %v285, %v286
        %v288 = vrot.slane %v287, 2
        %v289 = vadd.f32 %v287, %v288
        %v290 = vrot.slane %v289, 1
        %v291 = vadd.f32 %v289, %v290
        %s292 = vtos %v291
        %p293 = scmp.gt.f32.partialorder %s292, 0.0
        %s294 = scalar_select %p293, 1, 0
        %v295 = vstv %s294
        %vm296 = vcmask 0
        %297 = vst.msk [vmem:[%s271] sm:$0x1] %vm296, %v295
        // Predicated region
        $region37: #{tpu_custom_call.1} parent=27 // pred_check
          %p298 = pneg %p293
        $region38: #{tpu_custom_call.1} parent=27 // pred_check_branch
          %300 = sbr.rel (%p298) target = $region40
        $region39: #{tpu_custom_call.1} parent=27 // pred_region
          %301 = vst.msk [vmem:[%s257] sm:$0xff] %vm280, %v278
          %302 = vst.msk [vmem:[%s257 + $0x8] sm:$0xff] %vm280, %v279
        $region40: #{tpu_custom_call.1} parent=27 // pred_fallthru
          _
        %p303 = pneg %p293
        // Predicated region
        $region41: #{tpu_custom_call.1} parent=27 // pred_check
          _
        $region42: #{tpu_custom_call.1} parent=27 // pred_check_branch
          %305 = sbr.rel (%p293) target = $region44
        $region43: #{tpu_custom_call.1} parent=27 // pred_region
          %306 = vst [vmem:[#allocation2] sm:$0xff] 0.0
          %307 = vst [vmem:[#allocation2 + $0x8] sm:$0xff] 0.0
          %308 = vst [vmem:[#allocation2 + $0x10] sm:$0xff] 0.0
          %309 = vst [vmem:[#allocation2 + $0x18] sm:$0xff] 0.0
          %v310 = vld [vmem:[%s223] sm:$0xff]
          %v311 = vld [vmem:[%s223 + $0x8] sm:$0xff]
          %vm312 = vcmp.ne.f32.partialorder %v310, 0.0
          %vm313 = vcmp.ne.f32.partialorder %v311, 0.0
          %v314 = vsel %vm312, 1, 0
          %v315 = vsel %vm313, 1, 0
          %v316 = vcvt.s32.f32 %v314
          %v317 = vcvt.s32.f32 %v315
          %318 = vst.msk [vmem:[#allocation2] sm:$0xff] %vm280, %v316
          %319 = vst.msk [vmem:[#allocation2 + $0x8] sm:$0xff] %vm280, %v317
          %v320 = vld [vmem:[#allocation2] sm:$0xff]
          %v321 = vld [vmem:[#allocation2 + $0x8] sm:$0xff]
          %v322 = vld [vmem:[#allocation2 + $0x10] sm:$0xff]
          %v323 = vld [vmem:[#allocation2 + $0x18] sm:$0xff]
          %v324 = vrot.slane %v320, 6
          %v325 = vrot.slane %v321, 6
          %v326 = vrot.slane %v322, 6
          %v327 = vrot.slane %v323, 6
          %v328 = vlaneseq
          %v329 = vshrl.u32 %v328, 7
          %vm330 = vcmp.lt.s32.totalorder %v329, 2
          %v331 = vsel %vm330, %v326, %v327
          %v332 = vsel %vm330, %v325, %v326
          %v333 = vsel %vm330, %v324, %v325
          %v334 = vsel %vm330, %v327, %v324
          %v335 = vrot.slane %v320, 2
          %v336 = vrot.slane %v321, 2
          %v337 = vrot.slane %v322, 2
          %v338 = vrot.slane %v323, 2
          %vm339 = vcmp.lt.s32.totalorder %v329, 6
          %v340 = vsel %vm339, %v337, %v338
          %v341 = vsel %vm339, %v336, %v337
          %v342 = vsel %vm339, %v335, %v336
          %v343 = vsel %vm339, %v338, %v335
          %v344 = vmax.f32 %v331, %v341
          %v345 = vmax.f32 %v334, %v340
          %v346 = vmax.f32 %v333, %v343
          %v347 = vmax.f32 %v332, %v342
          %348 = vrot.lane.b32.xlu0 %v320, 1
          %v349 = vpop.permute.xlu0 %348
          %350 = vrot.lane.b32.xlu0 %v321, 1
          %v351 = vpop.permute.xlu0 %350
          %352 = vrot.lane.b32.xlu0 %v322, 1
          %v353 = vpop.permute.xlu0 %352
          %354 = vrot.lane.b32.xlu0 %v323, 1
          %v355 = vpop.permute.xlu0 %354
          %356 = vrot.lane.b32.xlu0 %v320, 127
          %v357 = vpop.permute.xlu0 %356
          %358 = vrot.lane.b32.xlu0 %v321, 127
          %v359 = vpop.permute.xlu0 %358
          %360 = vrot.lane.b32.xlu0 %v322, 127
          %v361 = vpop.permute.xlu0 %360
          %362 = vrot.lane.b32.xlu0 %v323, 127
          %v363 = vpop.permute.xlu0 %362
          %v364 = vmax.f32 %v349, %v357
          %v365 = vmax.f32 %v351, %v359
          %v366 = vmax.f32 %v353, %v361
          %v367 = vmax.f32 %v355, %v363
          %v368 = vmax.f32 %v320, %v364
          %v369 = vmax.f32 %v321, %v365
          %v370 = vmax.f32 %v322, %v366
          %v371 = vmax.f32 %v323, %v367
          %372 = vrot.lane.b32.xlu0 %v320, 2
          %v373 = vpop.permute.xlu0 %372
          %374 = vrot.lane.b32.xlu0 %v321, 2
          %v375 = vpop.permute.xlu0 %374
          %376 = vrot.lane.b32.xlu0 %v322, 2
          %v377 = vpop.permute.xlu0 %376
          %378 = vrot.lane.b32.xlu0 %v323, 2
          %v379 = vpop.permute.xlu0 %378
          %380 = vrot.lane.b32.xlu0 %v320, 126
          %v381 = vpop.permute.xlu0 %380
          %382 = vrot.lane.b32.xlu0 %v321, 126
          %v383 = vpop.permute.xlu0 %382
          %384 = vrot.lane.b32.xlu0 %v322, 126
          %v385 = vpop.permute.xlu0 %384
          %386 = vrot.lane.b32.xlu0 %v323, 126
          %v387 = vpop.permute.xlu0 %386
          %v388 = vmax.f32 %v373, %v381
          %v389 = vmax.f32 %v375, %v383
          %v390 = vmax.f32 %v377, %v385
          %v391 = vmax.f32 %v379, %v387
          %v392 = vmax.f32 %v368, %v388
          %v393 = vmax.f32 %v369, %v389
          %v394 = vmax.f32 %v370, %v390
          %v395 = vmax.f32 %v371, %v391
          %396 = vrot.lane.b32.xlu0 %v320, 3
          %v397 = vpop.permute.xlu0 %396
          %398 = vrot.lane.b32.xlu0 %v321, 3
          %v399 = vpop.permute.xlu0 %398
          %400 = vrot.lane.b32.xlu0 %v322, 3
          %v401 = vpop.permute.xlu0 %400
          %402 = vrot.lane.b32.xlu0 %v323, 3
          %v403 = vpop.permute.xlu0 %402
          %404 = vrot.lane.b32.xlu0 %v320, 125
          %v405 = vpop.permute.xlu0 %404
          %406 = vrot.lane.b32.xlu0 %v321, 125
          %v407 = vpop.permute.xlu0 %406
          %408 = vrot.lane.b32.xlu0 %v322, 125
          %v409 = vpop.permute.xlu0 %408
          %410 = vrot.lane.b32.xlu0 %v323, 125
          %v411 = vpop.permute.xlu0 %410
          %v412 = vmax.f32 %v397, %v405
          %v413 = vmax.f32 %v399, %v407
          %v414 = vmax.f32 %v401, %v409
          %v415 = vmax.f32 %v403, %v411
          %v416 = vmax.f32 %v392, %v412
          %v417 = vmax.f32 %v393, %v413
          %v418 = vmax.f32 %v394, %v414
          %v419 = vmax.f32 %v395, %v415
          %420 = vrot.lane.b32.xlu0 %v320, 4
          %v421 = vpop.permute.xlu0 %420
          %422 = vrot.lane.b32.xlu0 %v321, 4
          %v423 = vpop.permute.xlu0 %422
          %424 = vrot.lane.b32.xlu0 %v322, 4
          %v425 = vpop.permute.xlu0 %424
          %426 = vrot.lane.b32.xlu0 %v323, 4
          %v427 = vpop.permute.xlu0 %426
          %428 = vrot.lane.b32.xlu0 %v320, 124
          %v429 = vpop.permute.xlu0 %428
          %430 = vrot.lane.b32.xlu0 %v321, 124
          %v431 = vpop.permute.xlu0 %430
          %432 = vrot.lane.b32.xlu0 %v322, 124
          %v433 = vpop.permute.xlu0 %432
          %434 = vrot.lane.b32.xlu0 %v323, 124
          %v435 = vpop.permute.xlu0 %434
          %v436 = vmax.f32 %v421, %v429
          %v437 = vmax.f32 %v423, %v431
          %v438 = vmax.f32 %v425, %v433
          %v439 = vmax.f32 %v427, %v435
          %v440 = vmax.f32 %v416, %v436
          %v441 = vmax.f32 %v417, %v437
          %v442 = vmax.f32 %v418, %v438
          %v443 = vmax.f32 %v419, %v439
          %v444 = vrot.slane %v440, 7
          %v445 = vrot.slane %v441, 7
          %v446 = vrot.slane %v442, 7
          %v447 = vrot.slane %v443, 7
          %vm448 = vcmp.lt.s32.totalorder %v329, 1
          %v449 = vsel %vm448, %v446, %v447
          %v450 = vsel %vm448, %v445, %v446
          %v451 = vsel %vm448, %v444, %v445
          %v452 = vsel %vm448, %v447, %v444
          %v453 = vrot.slane %v440, 1
          %v454 = vrot.slane %v441, 1
          %v455 = vrot.slane %v442, 1
          %v456 = vrot.slane %v443, 1
          %vm457 = vcmp.lt.s32.totalorder %v329, 7
          %v458 = vsel %vm457, %v455, %v456
          %v459 = vsel %vm457, %v454, %v455
          %v460 = vsel %vm457, %v453, %v454
          %v461 = vsel %vm457, %v456, %v453
          %v462 = vmax.f32 %v449, %v459
          %v463 = vmax.f32 %v452, %v458
          %v464 = vmax.f32 %v451, %v461
          %v465 = vmax.f32 %v450, %v460
          %v466 = vmax.f32 %v344, %v462
          %v467 = vmax.f32 %v345, %v463
          %v468 = vmax.f32 %v346, %v464
          %v469 = vmax.f32 %v347, %v465
          %470 = vrot.lane.b32.xlu0 %v320, 5
          %v471 = vpop.permute.xlu0 %470
          %472 = vrot.lane.b32.xlu0 %v321, 5
          %v473 = vpop.permute.xlu0 %472
          %474 = vrot.lane.b32.xlu0 %v322, 5
          %v475 = vpop.permute.xlu0 %474
          %476 = vrot.lane.b32.xlu0 %v323, 5
          %v477 = vpop.permute.xlu0 %476
          %478 = vrot.lane.b32.xlu0 %v320, 123
          %v479 = vpop.permute.xlu0 %478
          %480 = vrot.lane.b32.xlu0 %v321, 123
          %v481 = vpop.permute.xlu0 %480
          %482 = vrot.lane.b32.xlu0 %v322, 123
          %v483 = vpop.permute.xlu0 %482
          %484 = vrot.lane.b32.xlu0 %v323, 123
          %v485 = vpop.permute.xlu0 %484
          %v486 = vmax.f32 %v471, %v479
          %v487 = vmax.f32 %v473, %v481
          %v488 = vmax.f32 %v475, %v483
          %v489 = vmax.f32 %v477, %v485
          %v490 = vmax.f32 %v440, %v486
          %v491 = vmax.f32 %v441, %v487
          %v492 = vmax.f32 %v442, %v488
          %v493 = vmax.f32 %v443, %v489
          %494 = vrot.lane.b32.xlu0 %v320, 6
          %v495 = vpop.permute.xlu0 %494
          %496 = vrot.lane.b32.xlu0 %v321, 6
          %v497 = vpop.permute.xlu0 %496
          %498 = vrot.lane.b32.xlu0 %v322, 6
          %v499 = vpop.permute.xlu0 %498
          %500 = vrot.lane.b32.xlu0 %v323, 6
          %v501 = vpop.permute.xlu0 %500
          %502 = vrot.lane.b32.xlu0 %v320, 122
          %v503 = vpop.permute.xlu0 %502
          %504 = vrot.lane.b32.xlu0 %v321, 122
          %v505 = vpop.permute.xlu0 %504
          %506 = vrot.lane.b32.xlu0 %v322, 122
          %v507 = vpop.permute.xlu0 %506
          %508 = vrot.lane.b32.xlu0 %v323, 122
          %v509 = vpop.permute.xlu0 %508
          %v510 = vmax.f32 %v495, %v503
          %v511 = vmax.f32 %v497, %v505
          %v512 = vmax.f32 %v499, %v507
          %v513 = vmax.f32 %v501, %v509
          %v514 = vmax.f32 %v490, %v510
          %v515 = vmax.f32 %v491, %v511
          %v516 = vmax.f32 %v492, %v512
          %v517 = vmax.f32 %v493, %v513
          %v518 = vmax.f32 %v517, %v515
          %v519 = vmax.f32 %v514, %v516
          %v520 = vmax.f32 %v466, %v518
          %v521 = vmax.f32 %v467, %v519
          %v522 = vmax.f32 %v468, %v518
          %v523 = vmax.f32 %v469, %v519
          %524 = vrot.lane.b32.xlu0 %v320, 7
          %v525 = vpop.permute.xlu0 %524
          %526 = vrot.lane.b32.xlu0 %v321, 7
          %v527 = vpop.permute.xlu0 %526
          %528 = vrot.lane.b32.xlu0 %v322, 7
          %v529 = vpop.permute.xlu0 %528
          %530 = vrot.lane.b32.xlu0 %v323, 7
          %v531 = vpop.permute.xlu0 %530
          %532 = vrot.lane.b32.xlu0 %v320, 121
          %v533 = vpop.permute.xlu0 %532
          %534 = vrot.lane.b32.xlu0 %v321, 121
          %v535 = vpop.permute.xlu0 %534
          %536 = vrot.lane.b32.xlu0 %v322, 121
          %v537 = vpop.permute.xlu0 %536
          %538 = vrot.lane.b32.xlu0 %v323, 121
          %v539 = vpop.permute.xlu0 %538
          %v540 = vmax.f32 %v525, %v533
          %v541 = vmax.f32 %v527, %v535
          %v542 = vmax.f32 %v529, %v537
          %v543 = vmax.f32 %v531, %v539
          %v544 = vmax.f32 %v514, %v540
          %v545 = vmax.f32 %v515, %v541
          %v546 = vmax.f32 %v516, %v542
          %v547 = vmax.f32 %v517, %v543
          %v548 = vrot.slane %v544, 1
          %v549 = vrot.slane %v545, 1
          %v550 = vrot.slane %v546, 1
          %v551 = vrot.slane %v547, 1
          %v552 = vsel %vm457, %v550, %v551
          %v553 = vsel %vm457, %v549, %v550
          %v554 = vsel %vm457, %v548, %v549
          %v555 = vsel %vm457, %v551, %v548
          %v556 = vrot.slane %v544, 7
          %v557 = vrot.slane %v545, 7
          %v558 = vrot.slane %v546, 7
          %v559 = vrot.slane %v547, 7
          %v560 = vsel %vm448, %v558, %v559
          %v561 = vsel %vm448, %v557, %v558
          %v562 = vsel %vm448, %v556, %v557
          %v563 = vsel %vm448, %v559, %v556
          %v564 = vmax.f32 %v555, %v562
          %v565 = vmax.f32 %v554, %v561
          %v566 = vmax.f32 %v553, %v560
          %v567 = vmax.f32 %v552, %v563
          %v568 = vmax.f32 %v520, %v564
          %v569 = vmax.f32 %v521, %v565
          %v570 = vmax.f32 %v522, %v566
          %v571 = vmax.f32 %v523, %v567
          %572 = vrot.lane.b32.xlu0 %v320, 8
          %v573 = vpop.permute.xlu0 %572
          %574 = vrot.lane.b32.xlu0 %v321, 8
          %v575 = vpop.permute.xlu0 %574
          %576 = vrot.lane.b32.xlu0 %v322, 8
          %v577 = vpop.permute.xlu0 %576
          %578 = vrot.lane.b32.xlu0 %v323, 8
          %v579 = vpop.permute.xlu0 %578
          %580 = vrot.lane.b32.xlu0 %v320, 120
          %v581 = vpop.permute.xlu0 %580
          %582 = vrot.lane.b32.xlu0 %v321, 120
          %v583 = vpop.permute.xlu0 %582
          %584 = vrot.lane.b32.xlu0 %v322, 120
          %v585 = vpop.permute.xlu0 %584
          %586 = vrot.lane.b32.xlu0 %v323, 120
          %v587 = vpop.permute.xlu0 %586
          %v588 = vmax.f32 %v573, %v581
          %v589 = vmax.f32 %v575, %v583
          %v590 = vmax.f32 %v577, %v585
          %v591 = vmax.f32 %v579, %v587
          %v592 = vmax.f32 %v544, %v588
          %v593 = vmax.f32 %v545, %v589
          %v594 = vmax.f32 %v546, %v590
          %v595 = vmax.f32 %v547, %v591
          %v596 = vrot.slane %v592, 7
          %v597 = vrot.slane %v593, 7
          %v598 = vrot.slane %v594, 7
          %v599 = vrot.slane %v595, 7
          %v600 = vsel %vm448, %v598, %v599
          %v601 = vsel %vm448, %v597, %v598
          %v602 = vsel %vm448, %v596, %v597
          %v603 = vsel %vm448, %v599, %v596
          %v604 = vmax.f32 %v592, %v603
          %v605 = vmax.f32 %v593, %v602
          %v606 = vmax.f32 %v594, %v601
          %v607 = vmax.f32 %v595, %v600
          %v608 = vrot.slane %v604, 3
          %v609 = vrot.slane %v605, 3
          %v610 = vrot.slane %v606, 3
          %v611 = vrot.slane %v607, 3
          %vm612 = vcmp.lt.s32.totalorder %v329, 5
          %v613 = vsel %vm612, %v610, %v611
          %v614 = vsel %vm612, %v609, %v610
          %v615 = vsel %vm612, %v608, %v609
          %v616 = vsel %vm612, %v611, %v608
          %v617 = vrot.slane %v604, 6
          %v618 = vrot.slane %v605, 6
          %v619 = vrot.slane %v606, 6
          %v620 = vrot.slane %v607, 6
          %v621 = vsel %vm330, %v619, %v620
          %v622 = vsel %vm330, %v618, %v619
          %v623 = vsel %vm330, %v617, %v618
          %v624 = vsel %vm330, %v620, %v617
          %v625 = vmax.f32 %v616, %v623
          %v626 = vmax.f32 %v615, %v622
          %v627 = vmax.f32 %v614, %v621
          %v628 = vmax.f32 %v613, %v624
          %v629 = vmax.f32 %v568, %v625
          %v630 = vmax.f32 %v569, %v626
          %v631 = vmax.f32 %v570, %v627
          %v632 = vmax.f32 %v571, %v628
          %633 = vrot.lane.b32.xlu0 %v320, 9
          %v634 = vpop.permute.xlu0 %633
          %635 = vrot.lane.b32.xlu0 %v321, 9
          %v636 = vpop.permute.xlu0 %635
          %637 = vrot.lane.b32.xlu0 %v322, 9
          %v638 = vpop.permute.xlu0 %637
          %639 = vrot.lane.b32.xlu0 %v323, 9
          %v640 = vpop.permute.xlu0 %639
          %641 = vrot.lane.b32.xlu0 %v320, 119
          %v642 = vpop.permute.xlu0 %641
          %643 = vrot.lane.b32.xlu0 %v321, 119
          %v644 = vpop.permute.xlu0 %643
          %645 = vrot.lane.b32.xlu0 %v322, 119
          %v646 = vpop.permute.xlu0 %645
          %647 = vrot.lane.b32.xlu0 %v323, 119
          %v648 = vpop.permute.xlu0 %647
          %v649 = vmax.f32 %v634, %v642
          %v650 = vmax.f32 %v636, %v644
          %v651 = vmax.f32 %v638, %v646
          %v652 = vmax.f32 %v640, %v648
          %v653 = vmax.f32 %v592, %v649
          %v654 = vmax.f32 %v593, %v650
          %v655 = vmax.f32 %v594, %v651
          %v656 = vmax.f32 %v595, %v652
          %v657 = vrot.slane %v653, 7
          %v658 = vrot.slane %v654, 7
          %v659 = vrot.slane %v655, 7
          %v660 = vrot.slane %v656, 7
          %v661 = vsel %vm448, %v659, %v660
          %v662 = vsel %vm448, %v658, %v659
          %v663 = vsel %vm448, %v657, %v658
          %v664 = vsel %vm448, %v660, %v657
          %v665 = vmax.f32 %v653, %v664
          %v666 = vmax.f32 %v654, %v663
          %v667 = vmax.f32 %v655, %v662
          %v668 = vmax.f32 %v656, %v661
          %v669 = vrot.slane %v665, 6
          %v670 = vrot.slane %v666, 6
          %v671 = vrot.slane %v667, 6
          %v672 = vrot.slane %v668, 6
          %v673 = vsel %vm330, %v671, %v672
          %v674 = vsel %vm330, %v670, %v671
          %v675 = vsel %vm330, %v669, %v670
          %v676 = vsel %vm330, %v672, %v669
          %v677 = vmax.f32 %v665, %v676
          %v678 = vmax.f32 %v666, %v675
          %v679 = vmax.f32 %v667, %v674
          %v680 = vmax.f32 %v668, %v673
          %v681 = vrot.slane %v677, 7
          %v682 = vrot.slane %v678, 7
          %v683 = vrot.slane %v679, 7
          %v684 = vrot.slane %v680, 7
          %v685 = vsel %vm448, %v683, %v684
          %v686 = vsel %vm448, %v682, %v683
          %v687 = vsel %vm448, %v681, %v682
          %v688 = vsel %vm448, %v684, %v681
          %v689 = vrot.slane %v677, 4
          %v690 = vrot.slane %v678, 4
          %v691 = vrot.slane %v679, 4
          %v692 = vrot.slane %v680, 4
          %vm693 = vcmp.lt.s32.totalorder %v329, 4
          %v694 = vsel %vm693, %v691, %v692
          %v695 = vsel %vm693, %v690, %v691
          %v696 = vsel %vm693, %v689, %v690
          %v697 = vsel %vm693, %v692, %v689
          %v698 = vmax.f32 %v688, %v696
          %v699 = vmax.f32 %v687, %v695
          %v700 = vmax.f32 %v686, %v694
          %v701 = vmax.f32 %v685, %v697
          %v702 = vmax.f32 %v629, %v698
          %v703 = vmax.f32 %v630, %v699
          %v704 = vmax.f32 %v631, %v700
          %v705 = vmax.f32 %v632, %v701
          %706 = vrot.lane.b32.xlu0 %v320, 10
          %v707 = vpop.permute.xlu0 %706
          %708 = vrot.lane.b32.xlu0 %v321, 10
          %v709 = vpop.permute.xlu0 %708
          %710 = vrot.lane.b32.xlu0 %v322, 10
          %v711 = vpop.permute.xlu0 %710
          %712 = vrot.lane.b32.xlu0 %v323, 10
          %v713 = vpop.permute.xlu0 %712
          %714 = vrot.lane.b32.xlu0 %v320, 118
          %v715 = vpop.permute.xlu0 %714
          %716 = vrot.lane.b32.xlu0 %v321, 118
          %v717 = vpop.permute.xlu0 %716
          %718 = vrot.lane.b32.xlu0 %v322, 118
          %v719 = vpop.permute.xlu0 %718
          %720 = vrot.lane.b32.xlu0 %v323, 118
          %v721 = vpop.permute.xlu0 %720
          %v722 = vmax.f32 %v707, %v715
          %v723 = vmax.f32 %v709, %v717
          %v724 = vmax.f32 %v711, %v719
          %v725 = vmax.f32 %v713, %v721
          %v726 = vmax.f32 %v653, %v722
          %v727 = vmax.f32 %v654, %v723
          %v728 = vmax.f32 %v655, %v724
          %v729 = vmax.f32 %v656, %v725
          %v730 = vmax.f32 %v702, %v726
          %v731 = vmax.f32 %v703, %v727
          %v732 = vmax.f32 %v704, %v728
          %v733 = vmax.f32 %v705, %v729
          %v734 = vadd.s32 %v329, 8
          %v735 = vadd.s32 %v329, 16
          %v736 = vadd.s32 %v329, 24
          %v737 = vlaneseq
          %v738 = vand.u32 %v737, 127
          %vm739 = vcmp.lt.s32.totalorder %v329, 16
          %vm740 = vcmp.lt.s32.totalorder %v734, 16
          %vm741 = vcmp.lt.s32.totalorder %v735, 16
          %vm742 = vcmp.lt.s32.totalorder %v736, 16
          %vm743 = vcmp.lt.s32.totalorder %v738, 16
          %vm744 = vmand %vm739, %vm743
          %vm745 = vmand %vm740, %vm743
          %vm746 = vmand %vm741, %vm743
          %vm747 = vmand %vm742, %vm743
          %v748 = vsub.f32 1.0, %v730
          %v749 = vsub.f32 1.0, %v731
          %v750 = vsub.f32 1.0, %v732
          %v751 = vsub.f32 1.0, %v733
          %v752 = vsel %vm744, %v748, 0.0
          %v753 = vsel %vm745, %v749, 0.0
          %v754 = vsel %vm746, %v750, 0.0
          %v755 = vsel %vm747, %v751, 0.0
          %v756 = vrot.slane %v752, 7
          %v757 = vrot.slane %v753, 7
          %v758 = vrot.slane %v755, 7
          %v759 = vsel %vm448, %v756, %v757
          %v760 = vsel %vm448, %v758, %v756
          %v761 = vrot.slane %v752, 1
          %v762 = vrot.slane %v753, 1
          %v763 = vrot.slane %v754, 1
          %v764 = vsel %vm457, %v762, %v763
          %v765 = vsel %vm457, %v761, %v762
          %v766 = vmax.f32 %v760, %v765
          %v767 = vmax.f32 %v759, %v764
          %768 = vrot.lane.b32.xlu0 %v752, 1
          %v769 = vpop.permute.xlu0 %768
          %770 = vrot.lane.b32.xlu0 %v753, 1
          %v771 = vpop.permute.xlu0 %770
          %772 = vrot.lane.b32.xlu0 %v752, 127
          %v773 = vpop.permute.xlu0 %772
          %774 = vrot.lane.b32.xlu0 %v753, 127
          %v775 = vpop.permute.xlu0 %774
          %v776 = vmax.f32 %v769, %v773
          %v777 = vmax.f32 %v771, %v775
          %v778 = vmax.f32 %v752, %v776
          %v779 = vmax.f32 %v753, %v777
          %v780 = vmax.f32 %v766, %v778
          %v781 = vmax.f32 %v767, %v779
          %v782 = vsub.f32 %v780, %v752
          %v783 = vsub.f32 %v781, %v753
          %784 = vst.msk [vmem:[%s257] sm:$0xff] %vm280, %v782
          %785 = vst.msk [vmem:[%s257 + $0x8] sm:$0xff] %vm280, %v783
        $region44: #{tpu_custom_call.1} parent=27 // pred_fallthru
          _
        %s786 = sand.u32 %s103, 1
        %s787 = scalar_lea.sflag [#allocation7], %s786
        %s788 = sand.u32 %s103, 1
        %s789 = smul.addr %s788, 16
        %s790 = scalar_lea.vmem [#allocation10], %s789
        %p791 = scmp.lt.s32.totalorder %s29, 1
        %s792 = scalar_select %p791, %s29, 1
        %s793 = scalar_lea.vmem %s4, %s792
        // Predicated region
        $region45: #{tpu_custom_call.1} parent=27 // pred_check
          %p794 = pneg %p113
        $region46: #{tpu_custom_call.1} parent=27 // pred_check_branch
          %796 = sbr.rel (%p794) target = $region48
        $region47: #{tpu_custom_call.1} parent=27 // pred_region
          %s798 = ssub.s32 256, 256
          %799 = vsyncadd %s787, %s798
          %s800 = smul.addr %s29, 2
          %s801 = smul.addr %s800, 128
          %s802 = scalar_lea.hbm %s3, %s801
          %s803 = sshll.u32 %s790, 4
          %s804 = int_to_ptr.vmem [resolvable:$true] %s803
          %809 = dma.vmem_to_hbm [thread:$0]  %s804, 256, %s802, %s787, 128, 128, 8
        $region48: #{tpu_custom_call.1} parent=27 // pred_fallthru
          _
        // Predicated region
        $region49: #{tpu_custom_call.1} parent=27 // pred_check
          %p810 = pneg %p139
        $region50: #{tpu_custom_call.1} parent=27 // pred_check_branch
          %812 = sbr.rel (%p810) target = $region52
        $region51: #{tpu_custom_call.1} parent=27 // pred_region
          _
        $region52: #{tpu_custom_call.1} parent=27 // pred_fallthru
          _
      $region28: #{tpu_custom_call.1} parent=5 // pred_fallthru
        _
      %p813 = scmp.le.s32.totalorder 2, %s24
      // Predicated region
      $region53: #{tpu_custom_call.1} parent=5 // pred_check
        %p814 = pneg %p813
      $region54: #{tpu_custom_call.1} parent=5 // pred_check_branch
        %816 = sbr.rel (%p814) target = $region56
      $region55: #{tpu_custom_call.1} parent=5 // pred_region
        %s817 = ssub.s32 %s24, 2
        // Predicated region
        $region57: #{tpu_custom_call.1} parent=55 // pred_check
          %p818 = pneg %p119
        $region58: #{tpu_custom_call.1} parent=55 // pred_check_branch
          %820 = sbr.rel (%p818) target = $region60
        $region59: #{tpu_custom_call.1} parent=55 // pred_region
          %s821 = sand.u32 %s104, 1
          %s822 = scalar_lea.sflag [#allocation7], %s821
          %s823 = sand.u32 %s104, 1
          %s824 = smul.addr %s823, 16
          %s825 = scalar_lea.vmem [#allocation10], %s824
          %826 = dma.done %s822, 256
        $region60: #{tpu_custom_call.1} parent=55 // pred_fallthru
          _
        // Predicated region
        $region61: #{tpu_custom_call.1} parent=55 // pred_check
          %p827 = pneg %p145
        $region62: #{tpu_custom_call.1} parent=55 // pred_check_branch
          %829 = sbr.rel (%p827) target = $region64
        $region63: #{tpu_custom_call.1} parent=55 // pred_region
          %p830 = scmp.lt.s32.totalorder %s30, 1
          %s831 = scalar_select %p830, %s30, 1
          %s832 = scalar_lea.vmem %s4, %s831
        $region64: #{tpu_custom_call.1} parent=55 // pred_fallthru
          _
      $region56: #{tpu_custom_call.1} parent=5 // pred_fallthru
        _
    $region6: #{tpu_custom_call.1} parent=1 // loop_footer
      %s28 = sadd.s32 1, %s24
    $region7: #{tpu_custom_call.1} parent=1 // loop_footer_branch
      %23 = sbr.rel target = $region3
    $region8: #{tpu_custom_call.1} parent=1 // loop_exit
      _
    %833 = vsyncpa [#allocation6], 1
    %s834 = scalar_lea.sflag [#allocation6], 1
    %835 = vsyncpa %s834, 1
    %836 = vsyncpa [#allocation9], 1
    %s837 = scalar_lea.sflag [#allocation9], 1
    %838 = vsyncpa %s837, 1
    %839 = vsyncpa [#allocation7], 1
    %s840 = scalar_lea.sflag [#allocation7], 1
    %841 = vsyncpa %s840, 1

</llo_original>
